<compile_context>
chip_gen: v6e
topology: v6e:2x2x1
jax: 0.10.0
libtpu: 0.0.40
codegen_flags: <defaults>
</compile_context>

<pallas_src>
import jax
import jax.numpy as jnp
from jax.experimental import pallas as pl
from jax.experimental.pallas import tpu as pltpu

LOGISTIC_LOC = 0.0    # `a` in the reference code
LOGISTIC_SCALE = 1.0  # `b` in the reference code (kernel math below assumes b == 1)

_LANES = 128
_MAX_BLOCK_ROWS = 512          # 512 x 128 f32 = 256 KiB per buffer -> fits v5e/v6e/v7x
_INV_2POW23 = 1.0 / (1 << 23)


def stochastic_sign_kernel(x_ref, bits_ref, out_ref):
    x = x_ref[...]                       # (block_rows, 128) f32
    bits = bits_ref[...]                 # (2, block_rows, 128) uint32

    # Raw 32-bit random bits -> float32 uniforms in the open interval (0, 1):
    # keep the top 23 bits and center in the bin (never exactly 0 or 1).
    mant = jax.lax.shift_right_logical(bits, jnp.uint32(9)).astype(jnp.int32)
    u = (mant.astype(jnp.float32) + 0.5) * jnp.float32(_INV_2POW23)
    u_z = u[0]                           # logistic-noise uniform
    u_b = u[1]                           # bernoulli uniform

    # bernoulli(sigmoid(x - z)) with z = logit(u_z)  (a = 0, b = 1):
    #   u_b < sigmoid(x - logit(u_z))
    #   <=>  logit(u_b) + logit(u_z) < x
    #   <=>  log(u_b * u_z) - log((1 - u_b) * (1 - u_z)) < x
    # Only 2 EUP transcendentals per element; products run on the VPU.
    t = jnp.log(u_z * u_b) - jnp.log((1.0 - u_z) * (1.0 - u_b))

    # bernoulli sample with zeros remapped to -1.  The STE term
    # out.detach() + (p - p.detach()) leaves the forward value unchanged.
    out_ref[...] = jnp.where(t < x, 1.0, -1.0).astype(out_ref.dtype)


def stochastic_sign_ste(x, key=None, seed=0):
    """Elementwise StochasticSignSTE forward. Returns a ±1 tensor shaped like x."""
    if key is None:
        key = jax.random.PRNGKey(seed)

    orig_shape = x.shape
    orig_dtype = x.dtype
    flat = x.reshape(-1).astype(jnp.float32)
    n = flat.shape[0]

    rows = -(-n // _LANES)
    if rows >= _MAX_BLOCK_ROWS:
        block_rows = _MAX_BLOCK_ROWS
    else:
        block_rows = -(-rows // 8) * 8               # sublane multiple of 8
    rows_pad = -(-rows // block_rows) * block_rows   # pad rows to block multiple

    pad = rows_pad * _LANES - n
    if pad:
        flat = jnp.pad(flat, (0, pad))
    x2 = flat.reshape(rows_pad, _LANES)

    # One draw covering both uniform streams for the whole (padded) slab.
    # Generated outside the kernel -> no per-block/per-core seed correlation.
    bits = jax.random.bits(key, (2, rows_pad, _LANES), dtype=jnp.uint32)

    grid = (rows_pad // block_rows,)

    out2 = pl.pallas_call(
        stochastic_sign_kernel,
        out_shape=jax.ShapeDtypeStruct((rows_pad, _LANES), jnp.float32),
        grid=grid,
        in_specs=[
            pl.BlockSpec((block_rows, _LANES), lambda i: (i, 0)),       # x tile
            pl.BlockSpec((2, block_rows, _LANES), lambda i: (0, i, 0)), # bits tile
        ],
        out_specs=pl.BlockSpec((block_rows, _LANES), lambda i: (i, 0)),
        compiler_params=pltpu.CompilerParams(
            dimension_semantics=("parallel",),
            vmem_limit_bytes=32 * 1024 * 1024,
        ),
    )(x2, bits)

    out = out2.reshape(-1)
    if pad:
        out = out[:n]
    return out.reshape(orig_shape).astype(orig_dtype)


if __name__ == "__main__":
    key = jax.random.PRNGKey(0)
    k_x, k_noise = jax.random.split(key)

    # NCHW input, consistent with the CNN context of the module.
    x = jax.random.normal(k_x, (2, 4, 16, 16), dtype=jnp.float32)

    out = stochastic_sign_ste(x, key=k_noise)
    out = jax.block_until_ready(out)

    assert out.shape == x.shape
    assert out.dtype == jnp.float32
    # every element must be exactly +1 or -1
    assert bool(jnp.all(jnp.abs(out) == 1.0))
    # loose statistical sanity check: x ~ N(0,1) => mean(out) ~ 0
    assert abs(float(jnp.mean(out))) < 0.25

    print("KERNEL_OK")
</pallas_src>

<mosaic_0001>
module attributes {stable_mosaic.version = 11 : i64} {
  func.func @stochastic_sign_kernel(%arg0: i32, %arg1: memref<16x128xf32, #tpu.memory_space<vmem>>, %arg2: memref<2x16x128xi32, #tpu.memory_space<vmem>>, %arg3: memref<16x128xf32, #tpu.memory_space<vmem>>) attributes {dimension_semantics = [#tpu.dimension_semantics<parallel>], iteration_bounds = array<i64: 1>, scalar_prefetch = 0 : i64, scratch_operands = 0 : i64, tpu.core_type = #tpu.core_type<tc>, window_params = [{transform_indices = @transform_0, window_bounds = array<i64: 16, 128>}, {transform_indices = @transform_1, window_bounds = array<i64: 2, 16, 128>}, {transform_indices = @transform_2, window_bounds = array<i64: 16, 128>}]} {
    %c0 = arith.constant 0 : index
    %c0_0 = arith.constant 0 : index
    %0 = vector.load %arg1[%c0, %c0_0] : memref<16x128xf32, #tpu.memory_space<vmem>>, vector<16x128xf32>
    %c0_1 = arith.constant 0 : index
    %c0_2 = arith.constant 0 : index
    %c0_3 = arith.constant 0 : index
    %1 = vector.load %arg2[%c0_1, %c0_2, %c0_3] : memref<2x16x128xi32, #tpu.memory_space<vmem>>, vector<2x16x128xi32>
    %c9_i32 = arith.constant 9 : i32
    %2 = vector.broadcast %c9_i32 : i32 to vector<2x16x128xi32>
    %3 = arith.shrui %1, %2 : vector<2x16x128xi32>
    %4 = arith.sitofp %3 : vector<2x16x128xi32> to vector<2x16x128xf32>
    %cst = arith.constant 5.000000e-01 : f32
    %5 = vector.broadcast %cst : f32 to vector<2x16x128xf32>
    %6 = arith.addf %4, %5 : vector<2x16x128xf32>
    %cst_4 = arith.constant 1.1920929E-7 : f32
    %7 = vector.broadcast %cst_4 : f32 to vector<2x16x128xf32>
    %8 = arith.mulf %6, %7 : vector<2x16x128xf32>
    %9 = vector.extract_strided_slice %8 {offsets = [0, 0, 0], sizes = [1, 16, 128], strides = [1, 1, 1]} : vector<2x16x128xf32> to vector<1x16x128xf32>
    %10 = vector.shape_cast %9 : vector<1x16x128xf32> to vector<16x128xf32>
    %11 = vector.extract_strided_slice %8 {offsets = [1, 0, 0], sizes = [1, 16, 128], strides = [1, 1, 1]} : vector<2x16x128xf32> to vector<1x16x128xf32>
    %12 = vector.shape_cast %11 : vector<1x16x128xf32> to vector<16x128xf32>
    %13 = arith.mulf %10, %12 : vector<16x128xf32>
    %14 = math.log %13 : vector<16x128xf32>
    %cst_5 = arith.constant 1.000000e+00 : f32
    %15 = vector.broadcast %cst_5 : f32 to vector<16x128xf32>
    %16 = arith.subf %15, %10 : vector<16x128xf32>
    %cst_6 = arith.constant 1.000000e+00 : f32
    %17 = vector.broadcast %cst_6 : f32 to vector<16x128xf32>
    %18 = arith.subf %17, %12 : vector<16x128xf32>
    %19 = arith.mulf %16, %18 : vector<16x128xf32>
    %20 = math.log %19 : vector<16x128xf32>
    %21 = arith.subf %14, %20 : vector<16x128xf32>
    %22 = arith.cmpf olt, %21, %0 : vector<16x128xf32>
    %cst_7 = arith.constant 1.000000e+00 : f32
    %cst_8 = arith.constant -1.000000e+00 : f32
    %23 = vector.broadcast %cst_7 : f32 to vector<16x128xf32>
    %24 = vector.broadcast %cst_8 : f32 to vector<16x128xf32>
    %25 = arith.select %22, %23, %24 : vector<16x128xi1>, vector<16x128xf32>
    %c0_9 = arith.constant 0 : index
    %c0_10 = arith.constant 0 : index
    %26 = vector.load %arg3[%c0_9, %c0_10] : memref<16x128xf32, #tpu.memory_space<vmem>>, vector<16x128xf32>
    tpu.vector_store %arg3[%c0_9, %c0_10], %25 {strides = array<i32>} : memref<16x128xf32, #tpu.memory_space<vmem>>, vector<16x128xf32>,
    return
  }
  func.func @transform_0(%arg0: i32) -> (i32, i32) {
    %c0_i32 = arith.constant 0 : i32
    %c0_i32_0 = arith.constant 0 : i32
    return %arg0, %c0_i32 : i32, i32
  }
  func.func @transform_1(%arg0: i32) -> (i32, i32, i32) {
    %c0_i32 = arith.constant 0 : i32
    %c0_i32_0 = arith.constant 0 : i32
    %c0_i32_1 = arith.constant 0 : i32
    return %c0_i32, %arg0, %c0_i32_0 : i32, i32, i32
  }
  func.func @transform_2(%arg0: i32) -> (i32, i32) {
    %c0_i32 = arith.constant 0 : i32
    %c0_i32_0 = arith.constant 0 : i32
    return %arg0, %c0_i32 : i32, i32
  }
}

</mosaic_0001>

<llo_original>
// kernel: tpu_custom_call.1
$region0: #{tpu_custom_call.1}
  #allocation0 [shape = 'u32[]', space=smem, size = 0x4, offset = 0x4, fixed_abs, tag = 'smem constant byte address 0x4 - core index']
  #allocation1 [shape = 'u32[144,128]{1,0:T(1,128)}', space=vmem, size = 0x12000, scoped, tag = 'internal scratch']
  %s0 = inlined_call_operand.hbm [shape: f32[16,128], index: 0, kind: input, shape index: {}]
  %s1 = inlined_call_operand.hbm [shape: u32[2,16,128], index: 1, kind: input, shape index: {}]
  %s2 = inlined_call_operand.hbm [shape: f32[16,128], index: 2, kind: output, shape index: {}]
  %s3 = sld [smem:[#allocation0]]
  $region26: #{tpu_custom_call.1} parent=0
    _
  %s5 = ssub.s32 1, %s3
  %s6 = scalar_select 0, %s5, %s3
  $region1: #{tpu_custom_call.1} parent=0
    #allocation2 [shape = 'u8[8192]{0}', space=vmem, size = 0x2000, scoped, tag = 'input window, operand 0, single buffered']
    #allocation3 [shape = 's32[1]{0}', space=sflag, size = 0x4, scoped, tag = 'scoped memory for tpu_custom_call.1']
    #allocation4 [shape = 's32[1]{0}', space=sflag, size = 0x4, scoped, tag = 'scoped memory for tpu_custom_call.1']
    #allocation5 [shape = 'u8[16384]{0}', space=vmem, size = 0x4000, scoped, tag = 'input window, operand 1, single buffered']
    #allocation6 [shape = 's32[1]{0}', space=sflag, size = 0x4, scoped, tag = 'scoped memory for tpu_custom_call.1']
    #allocation7 [shape = 'u8[8192]{0}', space=vmem, size = 0x2000, scoped, tag = 'output window, operand 0, single buffered']
    %7 = vsyncpa [#allocation3], 0
    %8 = vsyncpa [#allocation6], 0
    %9 = vsyncpa [#allocation4], 0
    // Predicated region
    $region2: #{tpu_custom_call.1} parent=1 // pred_check
      _
    $region3: #{tpu_custom_call.1} parent=1 // pred_check_branch
      %11 = sbr.rel (0) target = $region5
    $region4: #{tpu_custom_call.1} parent=1 // pred_region
      %s13 = ssub.s32 256, 256
      %14 = vsyncadd [#allocation3], %s13
      %s15 = sshll.u32 [#allocation2], 4
      %s16 = int_to_ptr.vmem [resolvable:$true] %s15
      %21 = dma.hbm_to_vmem [thread:$0]  %s0, 256, %s16, [#allocation3], 128, 128, 8
    $region5: #{tpu_custom_call.1} parent=1 // pred_fallthru
      _
    // Predicated region
    $region6: #{tpu_custom_call.1} parent=1 // pred_check
      _
    $region7: #{tpu_custom_call.1} parent=1 // pred_check_branch
      %23 = sbr.rel (0) target = $region9
    $region8: #{tpu_custom_call.1} parent=1 // pred_region
      %s25 = ssub.s32 512, 512
      %26 = vsyncadd [#allocation6], %s25
      %s27 = sshll.u32 [#allocation5], 4
      %s28 = int_to_ptr.vmem [resolvable:$true] %s27
      %33 = dma.hbm_to_vmem [thread:$0]  %s1, 512, %s28, [#allocation6], 128, 128, 8
    $region9: #{tpu_custom_call.1} parent=1 // pred_fallthru
      _
    // Predicated region
    $region10: #{tpu_custom_call.1} parent=1 // pred_check
      _
    $region11: #{tpu_custom_call.1} parent=1 // pred_check_branch
      %35 = sbr.rel (0) target = $region13
    $region12: #{tpu_custom_call.1} parent=1 // pred_region
      %36 = dma.done [#allocation3], 256
    $region13: #{tpu_custom_call.1} parent=1 // pred_fallthru
      _
    // Predicated region
    $region14: #{tpu_custom_call.1} parent=1 // pred_check
      _
    $region15: #{tpu_custom_call.1} parent=1 // pred_check_branch
      %38 = sbr.rel (0) target = $region17
    $region16: #{tpu_custom_call.1} parent=1 // pred_region
      %39 = dma.done [#allocation6], 512
    $region17: #{tpu_custom_call.1} parent=1 // pred_fallthru
      _
    %v40 = vld [vmem:[#allocation2] sm:$0xff]
    %v41 = vld [vmem:[#allocation2 + $0x8] sm:$0xff]
    %v42 = vld [vmem:[#allocation5] sm:$0xff]
    %v43 = vld [vmem:[#allocation5 + $0x8] sm:$0xff]
    %v44 = vld [vmem:[#allocation5 + $0x10] sm:$0xff]
    %v45 = vld [vmem:[#allocation5 + $0x18] sm:$0xff]
    %v46 = vshrl.u32 %v42, 9
    %v47 = vshrl.u32 %v43, 9
    %v48 = vshrl.u32 %v44, 9
    %v49 = vshrl.u32 %v45, 9
    %v50 = vcvt.s32.f32 %v46
    %v51 = vcvt.s32.f32 %v47
    %v52 = vcvt.s32.f32 %v48
    %v53 = vcvt.s32.f32 %v49
    %v54 = vadd.f32 %v50, 0.5
    %v55 = vadd.f32 %v51, 0.5
    %v56 = vadd.f32 %v52, 0.5
    %v57 = vadd.f32 %v53, 0.5
    %v58 = vmul.f32 %v54, 1.1920929e-07
    %v59 = vmul.f32 %v55, 1.1920929e-07
    %v60 = vmul.f32 %v56, 1.1920929e-07
    %v61 = vmul.f32 %v57, 1.1920929e-07
    %v62 = vmul.f32 %v58, %v60
    %v63 = vmul.f32 %v59, %v61
    %v64 = vlog2.pop %v62
    %v65 = vmul.f32 %v64, 0.6931472
    %v66 = vlog2.pop %v63
    %v67 = vmul.f32 %v66, 0.6931472
    %v68 = vsub.f32 1.0, %v58
    %v69 = vsub.f32 1.0, %v59
    %v70 = vsub.f32 1.0, %v60
    %v71 = vsub.f32 1.0, %v61
    %v72 = vmul.f32 %v68, %v70
    %v73 = vmul.f32 %v69, %v71
    %v74 = vlog2.pop %v72
    %v75 = vmul.f32 %v74, 0.6931472
    %v76 = vlog2.pop %v73
    %v77 = vmul.f32 %v76, 0.6931472
    %v78 = vsub.f32 %v65, %v75
    %v79 = vsub.f32 %v67, %v77
    %vm80 = vcmp.lt.f32.partialorder %v78, %v40
    %vm81 = vcmp.lt.f32.partialorder %v79, %v41
    %v82 = vsel %vm80, 1.0, -1.0
    %v83 = vsel %vm81, 1.0, -1.0
    %84 = vst [vmem:[#allocation7] sm:$0xff] %v82
    %85 = vst [vmem:[#allocation7 + $0x8] sm:$0xff] %v83
    // Predicated region
    $region18: #{tpu_custom_call.1} parent=1 // pred_check
      _
    $region19: #{tpu_custom_call.1} parent=1 // pred_check_branch
      %87 = sbr.rel (0) target = $region21
    $region20: #{tpu_custom_call.1} parent=1 // pred_region
      %s89 = ssub.s32 256, 256
      %90 = vsyncadd [#allocation4], %s89
      %s91 = sshll.u32 [#allocation7], 4
      %s92 = int_to_ptr.vmem [resolvable:$true] %s91
      %97 = dma.vmem_to_hbm [thread:$0]  %s92, 256, %s2, [#allocation4], 128, 128, 8
    $region21: #{tpu_custom_call.1} parent=1 // pred_fallthru
      _
    // Predicated region
    $region22: #{tpu_custom_call.1} parent=1 // pred_check
      _
    $region23: #{tpu_custom_call.1} parent=1 // pred_check_branch
      %99 = sbr.rel (0) target = $region25
    $region24: #{tpu_custom_call.1} parent=1 // pred_region
      %100 = dma.done [#allocation4], 256
    $region25: #{tpu_custom_call.1} parent=1 // pred_fallthru
      _
    %101 = vsyncpa [#allocation3], 1
    %102 = vsyncpa [#allocation6], 1
    %103 = vsyncpa [#allocation4], 1

</llo_original>
